<compile_context>
chip_gen: v5e
topology: v5e:2x2
jax: 0.10.0
libtpu: 0.0.40
codegen_flags: <defaults>
</compile_context>

<pallas_src>
import functools

import jax
import jax.numpy as jnp
from jax.experimental import pallas as pl
from jax.experimental.pallas import tpu as pltpu


def _round_up(x, m):
    return ((x + m - 1) // m) * m


def _sublane_multiple(dtype):
    # Native VMEM sublane tile: 8 for 4-byte, 16 for 2-byte, 32 for 1-byte dtypes.
    return max(8, 32 // jnp.dtype(dtype).itemsize)


def _vmem_limit_bytes():
    cap = 64 * 1024 * 1024  # conservative default = v7x physical VMEM per core
    try:
        info = pltpu.get_tpu_info()
        for name in ("vmem_capacity_bytes", "vmem_bytes", "vmem_size_bytes"):
            val = getattr(info, name, None)
            if val:
                cap = int(val)
                break
    except Exception:
        pass
    # ~45 MiB on 64 MiB parts (v7x), ~90 MiB on 128 MiB parts (v5e/v6e).
    return min(int(cap * 0.70), 112 * 1024 * 1024)


def _ce_kernel_class_minor(x_ref, t_ref, o_ref, *, n_valid, tile_n):
    """Lane-dense small-C path. x_ref: (C, tile_n) logits, t_ref: (1, tile_n)."""
    i = pl.program_id(0)
    x = x_ref[...].astype(jnp.float32)                      # (C, tile_n) f32 math
    t = t_ref[...]                                          # (1, tile_n) int32
    c, tn = x.shape

    # Stable log-sum-exp over classes (sublane reductions).
    m = jnp.max(x, axis=0, keepdims=True)                   # (1, tile_n)
    s = jnp.sum(jnp.exp(x - m), axis=0, keepdims=True)      # (1, tile_n)

    # Gather x[target[n], n] with a where() on a tiny (C, 1) class iota.
    cls = jax.lax.broadcasted_iota(jnp.int32, (c, 1), 0)    # (C, 1)
    picked = jnp.sum(jnp.where(cls == t, x, 0.0), axis=0, keepdims=True)

    # Mask padded tail samples (N padded up to a multiple of tile_n).
    lane = jax.lax.broadcasted_iota(jnp.int32, (1, tn), 1) + i * tile_n
    nll = jnp.where(lane < n_valid, m + jnp.log(s) - picked, 0.0)

    # Per-tile partial sum; wrapper divides by true N.
    o_ref[...] = jnp.sum(nll, axis=1, keepdims=True).reshape(1, 1, 1)


def _ce_kernel_row_major(x_ref, t_ref, o_ref, *, n_valid, tile_n):
    """Row-major path for C >= 128. x_ref: (tile_n, C), t_ref: (tile_n, 1)."""
    i = pl.program_id(0)
    x = x_ref[...].astype(jnp.float32)                      # (tile_n, C)
    t = t_ref[...]                                          # (tile_n, 1) int32
    tn, c = x.shape

    m = jnp.max(x, axis=1, keepdims=True)                   # (tile_n, 1)
    s = jnp.sum(jnp.exp(x - m), axis=1, keepdims=True)      # (tile_n, 1)

    cls = jax.lax.broadcasted_iota(jnp.int32, (1, c), 1)    # (1, C) class iota
    picked = jnp.sum(jnp.where(cls == t, x, 0.0), axis=1, keepdims=True)

    row = jax.lax.broadcasted_iota(jnp.int32, (tn, 1), 0) + i * tile_n
    nll = jnp.where(row < n_valid, m + jnp.log(s) - picked, 0.0)

    o_ref[...] = jnp.sum(nll, axis=0, keepdims=True).reshape(1, 1, 1)


def max_loss(inputs, target, *, max_type="softmax", tile_n=None):
    """inputs: (N, C) float logits; target: (N,) integer class ids. Returns scalar f32."""
    if max_type != "softmax":
        # TODO(synk): 'abs-max', 'square-max', 'plus-one-abs-max', 'non-negative-max'
        # raise NotImplementedError in the PyTorch module as well.
        raise NotImplementedError(max_type)

    n, c = inputs.shape
    itemsize = jnp.dtype(inputs.dtype).itemsize
    sub = _sublane_multiple(inputs.dtype)
    vmem_limit = _vmem_limit_bytes()

    class_minor = c < 128
    if class_minor:
        granule = 128                                        # samples live in lanes
        logits_bytes_per_sample = _round_up(c, sub) * itemsize
        target_bytes_per_sample = 8 * 4                      # (1, tile_n) i32 -> 8 sublanes
    else:
        granule = sub                                        # samples live in sublanes
        logits_bytes_per_sample = _round_up(c, 128) * itemsize
        target_bytes_per_sample = 128 * 4                    # (tile_n, 1) i32 lane-pads to 128

    per_sample = logits_bytes_per_sample + target_bytes_per_sample
    # Target ~8 MiB per logits buffer; everything (double-buffered) must fit the limit.
    target_tile = (8 * 1024 * 1024) // logits_bytes_per_sample
    budget_tile = max(granule, (vmem_limit - 4 * 1024 * 1024) // (2 * per_sample))
    if tile_n is None:
        tile_n = min(target_tile, budget_tile)
    tile_n = max(granule, min(int(tile_n), _round_up(n, granule)))
    tile_n = max(granule, (tile_n // granule) * granule)

    grid_n = pl.cdiv(n, tile_n)
    n_pad = grid_n * tile_n

    t_idx = target.astype(jnp.int32)
    if class_minor:
        x = jnp.transpose(inputs)                            # (C, N): lane-dense samples
        t2d = t_idx.reshape(1, n)
        if n_pad != n:
            x = jnp.pad(x, ((0, 0), (0, n_pad - n)))
            t2d = jnp.pad(t2d, ((0, 0), (0, n_pad - n)))
        kernel = functools.partial(_ce_kernel_class_minor, n_valid=n, tile_n=tile_n)
        in_specs = [
            pl.BlockSpec((c, tile_n), lambda i: (0, i)),
            pl.BlockSpec((1, tile_n), lambda i: (0, i)),
        ]
    else:
        x = inputs
        t2d = t_idx.reshape(n, 1)
        if n_pad != n:
            x = jnp.pad(x, ((0, n_pad - n), (0, 0)))
            t2d = jnp.pad(t2d, ((0, n_pad - n), (0, 0)))
        kernel = functools.partial(_ce_kernel_row_major, n_valid=n, tile_n=tile_n)
        in_specs = [
            pl.BlockSpec((tile_n, c), lambda i: (i, 0)),
            pl.BlockSpec((tile_n, 1), lambda i: (i, 0)),
        ]

    partials = pl.pallas_call(
        kernel,
        out_shape=jax.ShapeDtypeStruct((grid_n, 1, 1), jnp.float32),
        grid_spec=pltpu.PrefetchScalarGridSpec(
            num_scalar_prefetch=0,
            grid=(grid_n,),
            in_specs=in_specs,
            out_specs=pl.BlockSpec((1, 1, 1), lambda i: (i, 0, 0)),
        ),
        compiler_params=pltpu.CompilerParams(
            # No carried state: each step owns its output block -> batch axis is
            # parallel (lets v7x's two TensorCores split the grid).
            dimension_semantics=("parallel",),
            vmem_limit_bytes=vmem_limit,
        ),
    )(x, t2d)

    # Mean over the true batch size (padded samples contributed exactly 0).
    return jnp.sum(partials) / jnp.float32(n)


if __name__ == "__main__":
    key = jax.random.PRNGKey(0)
    k1, k2, k3, k4, k5, k6 = jax.random.split(key, 6)

    def ref_loss(logits, target):
        logp = jax.nn.log_softmax(logits.astype(jnp.float32), axis=1)
        return -jnp.mean(jnp.take_along_axis(logp, target[:, None], axis=1)[:, 0])

    # Case 1: SVHN-like tiny problem (batch=8, 10 classes) -> lane-dense class-minor path.
    N, C = 8, 10
    logits = jax.random.normal(k1, (N, C), dtype=jnp.float32)
    target = jax.random.randint(k2, (N,), 0, C, dtype=jnp.int32)
    loss = max_loss(logits, target)
    jax.block_until_ready(loss)
    ref = ref_loss(logits, target)
    assert jnp.allclose(loss, ref, atol=1e-5, rtol=1e-4), (loss, ref)

    # Case 2: multi-step grid + tail masking + partial-sum reduction (class-minor path).
    N2, C2 = 200, 10
    logits2 = 4.0 * jax.random.normal(k3, (N2, C2), dtype=jnp.float32)
    target2 = jax.random.randint(k4, (N2,), 0, C2, dtype=jnp.int32)
    loss2 = max_loss(logits2, target2, tile_n=128)
    jax.block_until_ready(loss2)
    ref2 = ref_loss(logits2, target2)
    assert jnp.allclose(loss2, ref2, atol=1e-5, rtol=1e-4), (loss2, ref2)

    # Case 3: C >= 128 -> row-major (already lane-dense) path.
    N3, C3 = 24, 128
    logits3 = jax.random.normal(k5, (N3, C3), dtype=jnp.float32)
    target3 = jax.random.randint(k6, (N3,), 0, C3, dtype=jnp.int32)
    loss3 = max_loss(logits3, target3)
    jax.block_until_ready(loss3)
    ref3 = ref_loss(logits3, target3)
    assert jnp.allclose(loss3, ref3, atol=1e-5, rtol=1e-4), (loss3, ref3)

    print("KERNEL_OK")
</pallas_src>

<mosaic_0001>
module attributes {stable_mosaic.version = 11 : i64} {
  func.func @_ce_kernel_class_minor(%arg0: i32, %arg1: memref<10x128xf32, #tpu.memory_space<vmem>>, %arg2: memref<1x128xi32, #tpu.memory_space<vmem>>, %arg3: memref<1x1x1xf32, #tpu.memory_space<vmem>>) attributes {dimension_semantics = [#tpu.dimension_semantics<parallel>], iteration_bounds = array<i64: 1>, scalar_prefetch = 0 : i64, scratch_operands = 0 : i64, tpu.core_type = #tpu.core_type<tc>, window_params = [{transform_indices = @transform_0, window_bounds = array<i64: 10, 128>}, {transform_indices = @transform_1, window_bounds = array<i64: 1, 128>}, {transform_indices = @transform_2, window_bounds = array<i64: 1, 1, 1>}]} {
    %c0 = arith.constant 0 : index
    %c0_0 = arith.constant 0 : index
    %0 = vector.load %arg1[%c0, %c0_0] : memref<10x128xf32, #tpu.memory_space<vmem>>, vector<10x128xf32>
    %c0_1 = arith.constant 0 : index
    %c0_2 = arith.constant 0 : index
    %1 = vector.load %arg2[%c0_1, %c0_2] : memref<1x128xi32, #tpu.memory_space<vmem>>, vector<1x128xi32>
    %cst = arith.constant dense<0xFF800000> : vector<128xf32>
    %2 = vector.multi_reduction <maximumf>, %0, %cst [0] : vector<10x128xf32> to vector<128xf32>
    %3 = vector.shape_cast %2 : vector<128xf32> to vector<1x128xf32>
    %4 = vector.broadcast %3 : vector<1x128xf32> to vector<10x128xf32>
    %5 = arith.subf %0, %4 : vector<10x128xf32>
    %6 = math.exp %5 : vector<10x128xf32>
    %cst_3 = arith.constant dense<0.000000e+00> : vector<128xf32>
    %7 = vector.multi_reduction <add>, %6, %cst_3 [0] : vector<10x128xf32> to vector<128xf32>
    %8 = vector.shape_cast %7 : vector<128xf32> to vector<1x128xf32>
    %9 = tpu.iota {dimensions = array<i32: 0>} : vector<10x1xi32>
    %10 = vector.broadcast %9 : vector<10x1xi32> to vector<10x128xi32>
    %11 = vector.broadcast %1 : vector<1x128xi32> to vector<10x128xi32>
    %12 = arith.cmpi eq, %10, %11 : vector<10x128xi32>
    %cst_4 = arith.constant 0.000000e+00 : f32
    %13 = vector.broadcast %cst_4 : f32 to vector<10x128xf32>
    %14 = arith.select %12, %0, %13 : vector<10x128xi1>, vector<10x128xf32>
    %cst_5 = arith.constant dense<0.000000e+00> : vector<128xf32>
    %15 = vector.multi_reduction <add>, %14, %cst_5 [0] : vector<10x128xf32> to vector<128xf32>
    %16 = vector.shape_cast %15 : vector<128xf32> to vector<1x128xf32>
    %17 = tpu.iota {dimensions = array<i32: 1>} : vector<1x128xi32>
    %c128_i32 = arith.constant 128 : i32
    %18 = arith.muli %arg0, %c128_i32 : i32
    %19 = vector.broadcast %18 : i32 to vector<1x128xi32>
    %20 = arith.addi %17, %19 : vector<1x128xi32>
    %c8_i32 = arith.constant 8 : i32
    %21 = vector.broadcast %c8_i32 : i32 to vector<1x128xi32>
    %22 = arith.cmpi slt, %20, %21 : vector<1x128xi32>
    %23 = math.log %8 : vector<1x128xf32>
    %24 = arith.addf %3, %23 : vector<1x128xf32>
    %25 = arith.subf %24, %16 : vector<1x128xf32>
    %cst_6 = arith.constant 0.000000e+00 : f32
    %26 = vector.broadcast %cst_6 : f32 to vector<1x128xf32>
    %27 = arith.select %22, %25, %26 : vector<1x128xi1>, vector<1x128xf32>
    %cst_7 = arith.constant dense<0.000000e+00> : vector<1xf32>
    %28 = vector.multi_reduction <add>, %27, %cst_7 [1] : vector<1x128xf32> to vector<1xf32>
    %29 = vector.shape_cast %28 : vector<1xf32> to vector<1x1xf32>
    %30 = vector.shape_cast %29 : vector<1x1xf32> to vector<1x1x1xf32>
    %c0_8 = arith.constant 0 : index
    %c0_9 = arith.constant 0 : index
    %c0_10 = arith.constant 0 : index
    %31 = vector.load %arg3[%c0_8, %c0_9, %c0_10] : memref<1x1x1xf32, #tpu.memory_space<vmem>>, vector<1x1x1xf32>
    tpu.vector_store %arg3[%c0_8, %c0_9, %c0_10], %30 {strides = array<i32>} : memref<1x1x1xf32, #tpu.memory_space<vmem>>, vector<1x1x1xf32>,
    return
  }
  func.func @transform_0(%arg0: i32) -> (i32, i32) {
    %c0_i32 = arith.constant 0 : i32
    %c0_i32_0 = arith.constant 0 : i32
    return %c0_i32, %arg0 : i32, i32
  }
  func.func @transform_1(%arg0: i32) -> (i32, i32) {
    %c0_i32 = arith.constant 0 : i32
    %c0_i32_0 = arith.constant 0 : i32
    return %c0_i32, %arg0 : i32, i32
  }
  func.func @transform_2(%arg0: i32) -> (i32, i32, i32) {
    %c0_i32 = arith.constant 0 : i32
    %c0_i32_0 = arith.constant 0 : i32
    %c0_i32_1 = arith.constant 0 : i32
    return %arg0, %c0_i32, %c0_i32_0 : i32, i32, i32
  }
}

</mosaic_0001>

<llo_original>
// kernel: tpu_custom_call.1
$region0: #{tpu_custom_call.1}
  #allocation0 [shape = 'u32[]', space=smem, size = 0x4, offset = 0x4, fixed_abs, tag = 'smem constant byte address 0x4 - core index']
  #allocation1 [shape = 'u32[72,128]{1,0:T(1,128)}', space=vmem, size = 0x9000, scoped, tag = 'internal scratch']
  %s0 = inlined_call_operand.hbm [shape: f32[10,128], index: 0, kind: input, shape index: {}]
  %s1 = inlined_call_operand.hbm [shape: s32[1,128], index: 1, kind: input, shape index: {}]
  %s2 = inlined_call_operand.hbm [shape: f32[1,1,1], index: 2, kind: output, shape index: {}]
  %s3 = sld [smem:[#allocation0]]
  $region26: #{tpu_custom_call.1} parent=0
    _
  %s5 = ssub.s32 1, %s3
  %s6 = scalar_select 0, %s5, %s3
  $region1: #{tpu_custom_call.1} parent=0
    #allocation2 [shape = 'u8[8192]{0}', space=vmem, size = 0x2000, scoped, tag = 'input window, operand 0, single buffered']
    #allocation3 [shape = 's32[1]{0}', space=sflag, size = 0x4, scoped, tag = 'scoped memory for tpu_custom_call.1']
    #allocation4 [shape = 's32[1]{0}', space=sflag, size = 0x4, scoped, tag = 'scoped memory for tpu_custom_call.1']
    #allocation5 [shape = 'u8[512]{0}', space=vmem, size = 0x400, scoped, tag = 'input window, operand 1, single buffered']
    #allocation6 [shape = 's32[1]{0}', space=sflag, size = 0x4, scoped, tag = 'scoped memory for tpu_custom_call.1']
    #allocation7 [shape = 'u8[512]{0}', space=vmem, size = 0x400, scoped, tag = 'output window, operand 0, single buffered']
    %7 = vsyncpa [#allocation3], 0
    %8 = vsyncpa [#allocation6], 0
    %9 = vsyncpa [#allocation4], 0
    // Predicated region
    $region2: #{tpu_custom_call.1} parent=1 // pred_check
      _
    $region3: #{tpu_custom_call.1} parent=1 // pred_check_branch
      %11 = sbr.rel (0) target = $region5
    $region4: #{tpu_custom_call.1} parent=1 // pred_region
      %13 = vsyncadd [#allocation3], 0
      %s14 = sshll.u32 %s0, 4
      %s15 = int_to_ptr.hbm [resolvable:$true] %s14
      %s16 = sshll.u32 [#allocation2], 4
      %s17 = int_to_ptr.vmem [resolvable:$true] %s16
      %22 = dma.hbm_to_vmem [thread:$0]  %s15, 256, %s17, [#allocation3], 128, 128, 8
    $region5: #{tpu_custom_call.1} parent=1 // pred_fallthru
      _
    // Predicated region
    $region6: #{tpu_custom_call.1} parent=1 // pred_check
      _
    $region7: #{tpu_custom_call.1} parent=1 // pred_check_branch
      %24 = sbr.rel (0) target = $region9
    $region8: #{tpu_custom_call.1} parent=1 // pred_region
      %26 = vsyncadd [#allocation6], 0
      %s28 = sshll.u32 %s1, 4
      %s29 = int_to_ptr.hbm [resolvable:$true] %s28
      %s30 = sshll.u32 [#allocation5], 4
      %s31 = int_to_ptr.vmem [resolvable:$true] %s30
      %33 = dma.hbm_to_vmem [thread:$0]  %s29, 16, %s31, [#allocation6]
    $region9: #{tpu_custom_call.1} parent=1 // pred_fallthru
      _
    // Predicated region
    $region10: #{tpu_custom_call.1} parent=1 // pred_check
      _
    $region11: #{tpu_custom_call.1} parent=1 // pred_check_branch
      %35 = sbr.rel (0) target = $region13
    $region12: #{tpu_custom_call.1} parent=1 // pred_region
      %37 = dma.done [#allocation3], 256
    $region13: #{tpu_custom_call.1} parent=1 // pred_fallthru
      _
    // Predicated region
    $region14: #{tpu_custom_call.1} parent=1 // pred_check
      _
    $region15: #{tpu_custom_call.1} parent=1 // pred_check_branch
      %39 = sbr.rel (0) target = $region17
    $region16: #{tpu_custom_call.1} parent=1 // pred_region
      %41 = dma.done [#allocation6], 16
    $region17: #{tpu_custom_call.1} parent=1 // pred_fallthru
      _
    %v42 = vld [vmem:[#allocation2] sm:$0xff]
    %v43 = vld [vmem:[#allocation2 + $0x8] sm:$0x3]
    %v44 = vld [vmem:[#allocation5] sm:$0x1]
    %vm45 = vcmask 1041408
    %v46 = vsel %vm45, %v43, -inf
    %v47 = vmax.f32 %v42, %v46
    %v48 = vrot.slane %v47, 4
    %v49 = vmax.f32 %v47, %v48
    %v50 = vrot.slane %v49, 2
    %v51 = vmax.f32 %v49, %v50
    %v52 = vrot.slane %v51, 1
    %v53 = vmax.f32 %v51, %v52
    %v54 = vsub.f32 %v42, %v53
    %v55 = vsub.f32 %v43, %v53
    %v56 = vmul.f32 %v54, 1.442695
    %v57 = vpow.pop %v56
    %v58 = vmul.f32 %v55, 1.442695
    %v59 = vpow.pop %v58
    %v60 = vsel %vm45, %v59, 0.0
    %v61 = vadd.f32 %v57, %v60
    %v62 = vrot.slane %v61, 4
    %v63 = vadd.f32 %v61, %v62
    %v64 = vrot.slane %v63, 2
    %v65 = vadd.f32 %v63, %v64
    %v66 = vrot.slane %v65, 1
    %v67 = vadd.f32 %v65, %v66
    %v68 = vlaneseq
    %v69 = vshrl.u32 %v68, 7
    %v70 = vadd.s32 %v69, 8
    %v71 = vperm.slane %v44, 0
    %vm72 = vcmp.eq.s32.totalorder %v69, %v71
    %vm73 = vcmp.eq.s32.totalorder %v70, %v71
    %v74 = vsel %vm72, %v42, 0.0
    %v75 = vsel %vm73, %v43, 0.0
    %v76 = vsel %vm45, %v75, 0.0
    %v77 = vadd.f32 %v74, %v76
    %v78 = vrot.slane %v77, 4
    %v79 = vadd.f32 %v77, %v78
    %v80 = vrot.slane %v79, 2
    %v81 = vadd.f32 %v79, %v80
    %v82 = vrot.slane %v81, 1
    %v83 = vadd.f32 %v81, %v82
    %v84 = vlaneseq
    %v85 = vand.u32 %v84, 127
    %s86 = smul.u32 0, 128
    %v87 = vstv %s86
    %v88 = vadd.s32 %v85, %v87
    %vm89 = vcmp.lt.s32.totalorder %v88, 8
    %v90 = vlog2.pop %v67
    %v91 = vmul.f32 %v90, 0.6931472
    %v92 = vadd.f32 %v53, %v91
    %v93 = vsub.f32 %v92, %v83
    %v94 = vsel %vm89, %v93, 0.0
    %95 = vadd.xlane.f32.xlu0 %v94
    %v96 = vpop.xlane.xlu0 %95
    %vm97 = vcmask 0
    %98 = vst.msk [vmem:[#allocation7] sm:$0x1] %vm97, %v96
    // Predicated region
    $region18: #{tpu_custom_call.1} parent=1 // pred_check
      _
    $region19: #{tpu_custom_call.1} parent=1 // pred_check_branch
      %100 = sbr.rel (0) target = $region21
    $region20: #{tpu_custom_call.1} parent=1 // pred_region
      %102 = vsyncadd [#allocation4], 0
      %s104 = sshll.u32 [#allocation7], 4
      %s105 = int_to_ptr.vmem [resolvable:$true] %s104
      %s106 = sshll.u32 %s2, 4
      %s107 = int_to_ptr.hbm [resolvable:$true] %s106
      %109 = dma.vmem_to_hbm [thread:$0]  %s105, 16, %s107, [#allocation4]
    $region21: #{tpu_custom_call.1} parent=1 // pred_fallthru
      _
    // Predicated region
    $region22: #{tpu_custom_call.1} parent=1 // pred_check
      _
    $region23: #{tpu_custom_call.1} parent=1 // pred_check_branch
      %111 = sbr.rel (0) target = $region25
    $region24: #{tpu_custom_call.1} parent=1 // pred_region
      %113 = dma.done [#allocation4], 16
    $region25: #{tpu_custom_call.1} parent=1 // pred_fallthru
      _
    %114 = vsyncpa [#allocation3], 1
    %115 = vsyncpa [#allocation6], 1
    %116 = vsyncpa [#allocation4], 1

</llo_original>
